<compile_context>
chip_gen: v5e
topology: v5e:2x2
jax: 0.10.0
libtpu: 0.0.40
codegen_flags: <defaults>
</compile_context>

<pallas_src>
import math

import jax
import jax.numpy as jnp
from jax.experimental import pallas as pl
from jax.experimental.pallas import tpu as pltpu

_NSLOTS = 4  # outstanding replication DMAs (power of two)


def _build_kernel(tb, num_full, rem, nslots):
    """Kernel factory; tb / num_full / rem / nslots are trace-time constants."""
    assert nslots >= 1 and (nslots & (nslots - 1)) == 0
    mask = nslots - 1

    def kernel(p_ref, o_ref, buf, sems):
        # --- One-time fill of the replication buffer.  This is the only
        # VMEM-store traffic in the whole kernel; everything below is DMA.
        buf[...] = jnp.broadcast_to(p_ref[...], buf.shape)

        def issue(i, slot):
            pltpu.make_async_copy(
                buf, o_ref.at[pl.ds(i * tb, tb), :], sems.at[slot]).start()

        def wait_slot(slot):
            # Reconstructed descriptor: identical shapes => identical
            # semaphore byte count, so any row offset works for the wait.
            pltpu.make_async_copy(
                buf, o_ref.at[pl.ds(0, tb), :], sems.at[slot]).wait()

        if num_full <= nslots:
            # Few tiles: statically unroll issue-all then drain-all.
            for i in range(num_full):
                issue(i, i)
            for i in range(num_full):
                wait_slot(i)
        else:
            # Rotating-slot pipeline with up to `nslots` DMAs in flight.
            @pl.loop(0, num_full)
            def _(i):
                slot = i & mask

                @pl.when(i >= nslots)
                def _():
                    wait_slot(slot)          # retire the DMA from step i-nslots

                issue(i, slot)

            for s in range(nslots):          # drain the last nslots copies
                wait_slot(s)

        if rem > 0:
            # Static tail (out_B % tb rows); slot 0 is already drained.
            tail = pltpu.make_async_copy(
                buf.at[pl.ds(0, rem), :],
                o_ref.at[pl.ds(num_full * tb, rem), :],
                sems.at[0])
            tail.start()
            tail.wait()

    return kernel


def leaf_param_forward(x, p, *, target_tile_bytes=8 * 1024 * 1024):
    """Pallas equivalent of LeafParam.forward.

    Args:
      x: (B, ...) array -- only its leading (batch) dimension is used.
      p: (1, n) parameter array.
    Returns:
      (B, n) array equal to p broadcast over the batch dimension, in p.dtype.
    """
    B = x.shape[0]
    n = p.shape[-1]
    p2 = p.reshape(1, n)
    dtype = p2.dtype
    itemsize = jnp.dtype(dtype).itemsize

    # --- Lane packing: present a lane-dense (last dim % 128 == 0) output slab
    # when n is not a multiple of 128 and the batch folds cleanly.
    out_B, out_n = B, n
    p_row = p2
    if n % 128 != 0:
        k = 128 // math.gcd(n, 128)
        if k > 1 and B % k == 0:
            out_B = B // k
            out_n = n * k
            # Each row of the (B//k, k*n) row-major view is k copies of p.
            p_row = jnp.tile(p2, (1, k))
        # else: keep exact (B, n).  HBM destination slabs remain contiguous;
        # only the one-time VMEM fill uses masked stores (see header comment).

    # --- Generation-aware VMEM budget (v7x has only 64 MiB physical).
    try:
        vmem_cap = int(pltpu.get_tpu_info().vmem_capacity_bytes)
    except Exception:
        vmem_cap = 64 * 1024 * 1024  # conservative: assume the smallest (v7x)
    tile_budget = max(1, min(int(target_tile_bytes), vmem_cap // 4))

    # --- Tile rows: dtype-aware sublane packing (f32:8, bf16:16, i8/fp8:32),
    # sized purely by bytes (no artificial row cap).
    pack = max(8, 32 // itemsize)
    row_bytes = max(out_n * itemsize, 1)
    tb = (tile_budget // row_bytes) // pack * pack
    tb = max(pack, tb)
    tb = min(tb, out_B)

    num_full = out_B // tb
    rem = out_B - num_full * tb
    buf_bytes = tb * row_bytes

    # Request only what is actually needed (buffer + parameter row + margin),
    # capped well below physical VMEM on every generation.
    need_bytes = buf_bytes + 2 * out_n * itemsize + (2 << 20)
    vmem_limit = int(min(max(need_bytes, 8 << 20), max(32 << 20, vmem_cap // 2)))

    kernel = _build_kernel(tb, num_full, rem, _NSLOTS)

    out = pl.pallas_call(
        kernel,
        out_shape=jax.ShapeDtypeStruct((out_B, out_n), dtype),
        in_specs=[pl.BlockSpec(memory_space=pltpu.MemorySpace.VMEM)],  # p row
        out_specs=pl.BlockSpec(memory_space=pl.ANY),                   # raw HBM
        scratch_shapes=[
            pltpu.VMEM((tb, out_n), dtype),        # single replication buffer
            pltpu.SemaphoreType.DMA((_NSLOTS,)),   # rotating DMA semaphores
        ],
        compiler_params=pltpu.CompilerParams(vmem_limit_bytes=vmem_limit),
        cost_estimate=pl.CostEstimate(
            flops=0,
            transcendentals=0,
            # HBM writes of the full output + one read of the packed row.
            bytes_accessed=int((out_B * out_n + out_n) * itemsize),
        ),
    )(p_row)

    if (out_B, out_n) != (B, n):
        out = out.reshape(B, n)  # pure row-major view change (free)
    return out


class LeafParam:
    """JAX/Pallas port of the PyTorch LeafParam module."""

    def __init__(self, n, dtype=jnp.float32):
        # nn.Parameter(torch.zeros(1, n)) -> deterministic zeros init.
        self.p = jnp.zeros((1, n), dtype=dtype)

    def __call__(self, x):
        return leaf_param_forward(x, self.p)


if __name__ == "__main__":
    key = jax.random.PRNGKey(0)
    kx, kp1, kx2, kp2, kx3, kp3 = jax.random.split(key, 6)

    # --- 1) Module-faithful test (zeros parameter), B=8, n=32 (lane-packed).
    B, n = 8, 32
    x = jax.random.normal(kx, (B, n), dtype=jnp.float32)
    module = LeafParam(n)
    out = jax.block_until_ready(module(x))
    assert out.shape == (B, n), out.shape
    assert out.dtype == module.p.dtype
    assert bool(jnp.array_equal(out, jnp.broadcast_to(module.p, (B, n))))

    # --- 2) Non-trivial parameter, lane-packed fold path (n=32, k=4 | B).
    p1 = jax.random.normal(kp1, (1, n), dtype=jnp.float32)
    out1 = jax.block_until_ready(leaf_param_forward(x, p1))
    assert bool(jnp.array_equal(out1, jnp.broadcast_to(p1, (B, n))))

    # --- 3) Many tiles + tail: forced small tiles so the rotating-slot
    #         pl.loop path (num_full > _NSLOTS) and the tail DMA both run.
    B2, n2 = 84, 256
    x2 = jax.random.normal(kx2, (B2, n2), dtype=jnp.float32)
    p2 = jax.random.normal(kp2, (1, n2), dtype=jnp.float32)
    out2 = jax.block_until_ready(
        leaf_param_forward(x2, p2, target_tile_bytes=8 * n2 * 4))
    assert bool(jnp.array_equal(out2, jnp.broadcast_to(p2, (B2, n2))))

    # --- 4) Fallback path: n % 128 != 0 and B not divisible by the fold k.
    B3, n3 = 10, 48
    x3 = jax.random.normal(kx3, (B3, n3), dtype=jnp.float32)
    p3 = jax.random.normal(kp3, (1, n3), dtype=jnp.float32)
    out3 = jax.block_until_ready(leaf_param_forward(x3, p3))
    assert bool(jnp.array_equal(out3, jnp.broadcast_to(p3, (B3, n3))))

    print("KERNEL_OK")
</pallas_src>

<mosaic_0001>
module attributes {stable_mosaic.version = 11 : i64} {
  func.func @kernel(%arg0: memref<1x128xf32, #tpu.memory_space<vmem>>, %arg1: memref<2x128xf32, #tpu.memory_space<any>>, %arg2: memref<2x128xf32, #tpu.memory_space<vmem>>, %arg3: memref<4x!tpu.dma_semaphore, #tpu.memory_space<semaphore_mem>>) attributes {dimension_semantics = [], scalar_prefetch = 0 : i64, scratch_operands = 2 : i64, tpu.core_type = #tpu.core_type<tc>} {
    %c0 = arith.constant 0 : index
    %c0_0 = arith.constant 0 : index
    %0 = vector.load %arg0[%c0, %c0_0] : memref<1x128xf32, #tpu.memory_space<vmem>>, vector<1x128xf32>
    %1 = vector.shape_cast %0 : vector<1x128xf32> to vector<1x128xf32>
    %2 = vector.broadcast %1 : vector<1x128xf32> to vector<2x128xf32>
    %c0_1 = arith.constant 0 : index
    %c0_2 = arith.constant 0 : index
    %3 = vector.load %arg2[%c0_1, %c0_2] : memref<2x128xf32, #tpu.memory_space<vmem>>, vector<2x128xf32>
    tpu.vector_store %arg2[%c0_1, %c0_2], %2 {strides = array<i32>} : memref<2x128xf32, #tpu.memory_space<vmem>>, vector<2x128xf32>,
    %c0_i32 = arith.constant 0 : i32
    %c0_i32_3 = arith.constant 0 : i32
    %c0_i32_4 = arith.constant 0 : i32
    %4 = tpu.memref_slice %arg1[%c0_i32_3, %c0_i32_4] : memref<2x128xf32, #tpu.memory_space<any>> -> memref<2x128xf32, #tpu.memory_space<any>>
    %5 = tpu.memref_slice %arg3[%c0_i32] : memref<4x!tpu.dma_semaphore, #tpu.memory_space<semaphore_mem>> -> memref<1x!tpu.dma_semaphore, #tpu.memory_space<semaphore_mem>>
    %6 = tpu.memref_squeeze %5 : memref<1x!tpu.dma_semaphore, #tpu.memory_space<semaphore_mem>> -> memref<!tpu.dma_semaphore, #tpu.memory_space<semaphore_mem>>
    tpu.enqueue_dma source(%arg2 : memref<2x128xf32, #tpu.memory_space<vmem>>) target(%4 : memref<2x128xf32, #tpu.memory_space<any>>) target_semaphore(%6 : memref<!tpu.dma_semaphore, #tpu.memory_space<semaphore_mem>>)
    %c0_i32_5 = arith.constant 0 : i32
    %c0_i32_6 = arith.constant 0 : i32
    %c0_i32_7 = arith.constant 0 : i32
    %7 = tpu.memref_slice %arg1[%c0_i32_6, %c0_i32_7] : memref<2x128xf32, #tpu.memory_space<any>> -> memref<2x128xf32, #tpu.memory_space<any>>
    %8 = tpu.memref_slice %arg3[%c0_i32_5] : memref<4x!tpu.dma_semaphore, #tpu.memory_space<semaphore_mem>> -> memref<1x!tpu.dma_semaphore, #tpu.memory_space<semaphore_mem>>
    %9 = tpu.memref_squeeze %8 : memref<1x!tpu.dma_semaphore, #tpu.memory_space<semaphore_mem>> -> memref<!tpu.dma_semaphore, #tpu.memory_space<semaphore_mem>>
    tpu.wait_dma2 semaphore(%9 : memref<!tpu.dma_semaphore, #tpu.memory_space<semaphore_mem>>) src(%arg2 : memref<2x128xf32, #tpu.memory_space<vmem>>) dst(%7 : memref<2x128xf32, #tpu.memory_space<any>>)
    return
  }
}

</mosaic_0001>

<llo_original>
// kernel: tpu_custom_call.1
$region0: #{tpu_custom_call.1}
  #allocation0 [shape = 'u32[]', space=smem, size = 0x4, offset = 0x4, fixed_abs, tag = 'smem constant byte address 0x4 - core index']
  #allocation1 [shape = 'u32[72,128]{1,0:T(1,128)}', space=vmem, size = 0x9000, scoped, tag = 'internal scratch']
  #allocation2 [shape = 'f32[2,128]{1,0:T(2,128)}', space=vmem, size = 0x400, scoped, tag = 'scratch operand']
  #allocation3 [shape = 's32[4]{0}', space=sflag, size = 0x10, scoped, tag = 'scratch operand']
  #allocation6 [shape = 's32[]', space=sflag, size = 0x4, offset = 0, fixed_abs, tag = 'sflag constant byte address 0x0 - dummy sync flag']
  #allocation7 [shape = 's32[]', space=sflag, size = 0x4, offset = 0, fixed_abs, tag = 'sflag constant byte address 0x0 - dummy sync flag']
  #allocation8 [shape = 'u32[]', space=smem, size = 0x4, offset = 0x44, fixed_abs, tag = 'smem constant byte address 0x44 - assertion arg 0']
  #allocation9 [shape = 'u32[]', space=smem, size = 0x4, offset = 0x48, fixed_abs, tag = 'smem constant byte address 0x48 - assertion arg 1']
  %s0 = inlined_call_operand.hbm [shape: f32[1,128], index: 0, kind: input, shape index: {}]
  %s1 = inlined_call_operand.hbm [shape: f32[2,128], index: 1, kind: output, shape index: {}]
  %s2 = sld [smem:[#allocation0]]
  $region14: #{tpu_custom_call.1} parent=0
    _
  %s4 = ssub.s32 1, %s2
  %s5 = scalar_select 0, %s4, %s2
  $region1: #{tpu_custom_call.1} parent=0
    #allocation4 [shape = 'u8[512]{0}', space=vmem, size = 0x400, scoped, tag = 'input window, operand 0, single buffered']
    #allocation5 [shape = 's32[1]{0}', space=sflag, size = 0x4, scoped, tag = 'scoped memory for tpu_custom_call.1']
    %6 = vsyncpa [#allocation5], 0
    // Predicated region
    $region2: #{tpu_custom_call.1} parent=1 // pred_check
      _
    $region3: #{tpu_custom_call.1} parent=1 // pred_check_branch
      %8 = sbr.rel (0) target = $region5
    $region4: #{tpu_custom_call.1} parent=1 // pred_region
      %10 = vsyncadd [#allocation5], 0
      %s12 = sshll.u32 %s0, 4
      %s13 = int_to_ptr.hbm [resolvable:$true] %s12
      %s14 = sshll.u32 [#allocation4], 4
      %s15 = int_to_ptr.vmem [resolvable:$true] %s14
      %17 = dma.hbm_to_vmem [thread:$0]  %s13, 16, %s15, [#allocation5]
    $region5: #{tpu_custom_call.1} parent=1 // pred_fallthru
      _
    // Predicated region
    $region6: #{tpu_custom_call.1} parent=1 // pred_check
      _
    $region7: #{tpu_custom_call.1} parent=1 // pred_check_branch
      %19 = sbr.rel (0) target = $region9
    $region8: #{tpu_custom_call.1} parent=1 // pred_region
      %21 = dma.done [#allocation5], 16
    $region9: #{tpu_custom_call.1} parent=1 // pred_fallthru
      _
    %v22 = vld [vmem:[#allocation4] sm:$0x1]
    %v24 = vperm.slane %v22, 0
    %26 = vst [vmem:[#allocation2] sm:$0x3] %v24
    // Predicated region
    $region10: #{tpu_custom_call.1} parent=1 // pred_check
      _
    $region11: #{tpu_custom_call.1} parent=1 // pred_check_branch
      %28 = sbr.rel target = $region13
    $region12: #{tpu_custom_call.1} parent=1 // pred_region
      %29 = sst [smem:[#allocation8]] [#allocation7]
      %30 = sst [smem:[#allocation9]] [#allocation6]
    $region13: #{tpu_custom_call.1} parent=1 // pred_fallthru
      _
    %32 = shalt.err (0)
    %s34 = sshll.u32 [#allocation2], 4
    %s35 = int_to_ptr.vmem [resolvable:$true] %s34
    %s36 = sshll.u32 %s1, 4
    %s37 = int_to_ptr.hbm [resolvable:$true] %s36
    %39 = dma.vmem_to_hbm [thread:$0]  %s35, 32, %s37, [#allocation3]
    %s40 = smul.u32 2, 1
    %s41 = sshll.u32 %s40, 4
    %42 = dma.done [#allocation3], %s41
    %43 = vsyncpa [#allocation5], 1
  %44 = vsyncmov [#allocation3]
  %s45 = vpop.sfrf %44
  %p46 = scmp.eq.s32.totalorder %s45, 0
  %p47 = pneg %p46
  %49 = shalt.err (%p47)
  %s50 = scalar_lea.sflag [#allocation3], 1
  %51 = vsyncmov %s50
  %s52 = vpop.sfrf %51
  %p53 = scmp.eq.s32.totalorder %s52, 0
  %p54 = pneg %p53
  %56 = shalt.err (%p54)
  %s57 = scalar_lea.sflag [#allocation3], 2
  %58 = vsyncmov %s57
  %s59 = vpop.sfrf %58
  %p60 = scmp.eq.s32.totalorder %s59, 0
  %p61 = pneg %p60
  %63 = shalt.err (%p61)
  %s64 = scalar_lea.sflag [#allocation3], 3
  %65 = vsyncmov %s64
  %s66 = vpop.sfrf %65
  %p67 = scmp.eq.s32.totalorder %s66, 0
  %p68 = pneg %p67
  %70 = shalt.err (%p68)

</llo_original>
